<compile_context>
chip_gen: v6e
topology: v6e:2x2x1
jax: 0.10.0
libtpu: 0.0.40
codegen_flags: <defaults>
</compile_context>

<pallas_src>
import jax
import jax.numpy as jnp
from jax.experimental import pallas as pl
from jax.experimental.pallas import tpu as pltpu

EPS = 1e-5


def _mlp_kernel(
    x_ref,
    w1_ref, b1_ref, s1_ref, t1_ref,
    w2_ref, b2_ref, s2_ref, t2_ref,
    w3_ref, b3_ref, s3_ref, t3_ref,
    wo_ref, bo_ref,
    out_ref,
):
    # Hoist the (1, dim) parameter vectors into locals once per grid step so
    # their broadcasts are emitted a single time (JAX does not CSE them).
    b1 = b1_ref[...]; s1 = s1_ref[...]; t1 = t1_ref[...]
    b2 = b2_ref[...]; s2 = s2_ref[...]; t2 = t2_ref[...]
    b3 = b3_ref[...]; s3 = s3_ref[...]; t3 = t3_ref[...]
    wo = wo_ref[...]; bo = bo_ref[...]

    x = x_ref[...]  # (TB, F) bf16

    # layer1: Linear(F, 128) -> ReLU -> BN (folded affine). dropout1 = identity.
    h1 = jnp.dot(x, w1_ref[...], preferred_element_type=jnp.float32) + b1
    h1 = jnp.maximum(h1, 0.0) * s1 + t1

    # layer2: Linear(128, 64) -> ReLU -> BN, then residual with h1[:, :64].
    h2 = jnp.dot(h1.astype(jnp.bfloat16), w2_ref[...],
                 preferred_element_type=jnp.float32) + b2
    h2 = jnp.maximum(h2, 0.0) * s2 + t2
    h2 = h2 + h1[:, :64]

    # layer3: Linear(64, 32) -> ReLU -> BN, then residual with h2[:, :32].
    h3 = jnp.dot(h2.astype(jnp.bfloat16), w3_ref[...],
                 preferred_element_type=jnp.float32) + b3
    h3 = jnp.maximum(h3, 0.0) * s3 + t3
    h3 = h3 + h2[:, :32]

    # output: Linear(32, 1). An N=1 matmul wastes an MXU pass, so do it as a
    # VPU elementwise multiply + XLU cross-lane reduction instead.
    y = jnp.sum(h3 * wo, axis=-1, keepdims=True) + bo
    out_ref[...] = y.astype(out_ref.dtype)


def neural_network_forward(x, params, *, block_b=512):
    """x: (B, input_dim) float32. params: raw (PyTorch-style) weights. -> (B, 1) f32."""
    B, F = x.shape

    # Fold each eval-mode BatchNorm into a single per-channel affine.
    def fold_bn(g, be, m, v):
        scale = g * jax.lax.rsqrt(v + EPS)
        shift = be - m * scale
        return scale.astype(jnp.float32), shift.astype(jnp.float32)

    s1, t1 = fold_bn(params["g1"], params["be1"], params["m1"], params["v1"])
    s2, t2 = fold_bn(params["g2"], params["be2"], params["m2"], params["v2"])
    s3, t3 = fold_bn(params["g3"], params["be3"], params["m3"], params["v3"])

    # bf16 operands for the MXU; accumulation stays f32 inside the kernel.
    w1 = params["w1"].astype(jnp.bfloat16)
    w2 = params["w2"].astype(jnp.bfloat16)
    w3 = params["w3"].astype(jnp.bfloat16)
    wo_row = params["wo"].reshape(1, -1).astype(jnp.float32)  # (1, 32) for VPU path
    bo = params["bo"].reshape(1, 1).astype(jnp.float32)

    # Batch tile: multiple of 8 sublanes; pad B up so every grid tile is full.
    # block_b=512 keeps the double-buffered x tile + f32 intermediates well
    # inside v7x's 64 MiB VMEM while amortizing per-step overhead.
    tb = max(8, min(block_b, ((B + 7) // 8) * 8))
    n_tiles = pl.cdiv(B, tb)
    b_pad = n_tiles * tb

    xb = x.astype(jnp.bfloat16)  # halves the streamed x bytes
    if b_pad != B:
        xb = jnp.pad(xb, ((0, b_pad - B), (0, 0)))

    args = (
        xb,
        w1, params["b1"], s1, t1,
        w2, params["b2"], s2, t2,
        w3, params["b3"], s3, t3,
        wo_row, bo,
    )

    # Parameters: full-shape blocks with a constant index_map -> DMA'd once,
    # stay resident in VMEM across all batch tiles.
    def const_spec(a):
        return pl.BlockSpec(a.shape, lambda i: (0, 0))

    in_specs = [pl.BlockSpec((tb, F), lambda i: (i, 0))]
    in_specs += [const_spec(a) for a in args[1:]]
    out_spec = pl.BlockSpec((tb, 1), lambda i: (i, 0))

    flops = 2 * b_pad * (F * 128 + 128 * 64 + 64 * 32 + 32)
    param_bytes = sum(int(a.size) * jnp.dtype(a.dtype).itemsize for a in args[1:])
    bytes_accessed = int(xb.size) * 2 + param_bytes + b_pad * 4

    out = pl.pallas_call(
        _mlp_kernel,
        out_shape=jax.ShapeDtypeStruct((b_pad, 1), jnp.float32),
        grid=(n_tiles,),
        in_specs=in_specs,
        out_specs=out_spec,
        compiler_params=pltpu.CompilerParams(
            dimension_semantics=("parallel",)),
        cost_estimate=pl.CostEstimate(
            flops=flops, transcendentals=0, bytes_accessed=bytes_accessed),
    )(*args)
    return out[:B]


def init_params(key, input_dim):
    """Deterministic parameter init mirroring the PyTorch module's shapes.

    Linear weights are stored transposed ((in, out)) relative to PyTorch's
    (out, in) so the kernel computes x @ W directly.
    """
    ks = jax.random.split(key, 8)

    def lin(k, fan_in, fan_out):
        kw, kb = jax.random.split(k)
        bound = 1.0 / jnp.sqrt(fan_in)
        w = jax.random.uniform(kw, (fan_in, fan_out), jnp.float32, -bound, bound)
        b = jax.random.uniform(kb, (1, fan_out), jnp.float32, -bound, bound)
        return w, b

    def bn(k, dim):
        kg, kb, km, kv = jax.random.split(k, 4)
        gamma = 1.0 + 0.1 * jax.random.normal(kg, (1, dim), jnp.float32)
        beta = 0.1 * jax.random.normal(kb, (1, dim), jnp.float32)
        mean = 0.1 * jax.random.normal(km, (1, dim), jnp.float32)
        var = jnp.abs(1.0 + 0.1 * jax.random.normal(kv, (1, dim), jnp.float32))
        return gamma, beta, mean, var

    w1, b1 = lin(ks[0], input_dim, 128)
    g1, be1, m1, v1 = bn(ks[1], 128)
    w2, b2 = lin(ks[2], 128, 64)
    g2, be2, m2, v2 = bn(ks[3], 64)
    w3, b3 = lin(ks[4], 64, 32)
    g3, be3, m3, v3 = bn(ks[5], 32)
    wo, bo = lin(ks[6], 32, 1)

    return dict(
        w1=w1, b1=b1, g1=g1, be1=be1, m1=m1, v1=v1,
        w2=w2, b2=b2, g2=g2, be2=be2, m2=m2, v2=v2,
        w3=w3, b3=b3, g3=g3, be3=be3, m3=m3, v3=v3,
        wo=wo, bo=bo,
    )


def reference_forward(x, p):
    """Plain-JAX f32 reference (PyTorch eval semantics) for correctness checks."""
    def bn(h, g, be, m, v):
        return (h - m) / jnp.sqrt(v + EPS) * g + be

    h1 = bn(jnp.maximum(x @ p["w1"] + p["b1"], 0.0), p["g1"], p["be1"], p["m1"], p["v1"])
    h2 = bn(jnp.maximum(h1 @ p["w2"] + p["b2"], 0.0), p["g2"], p["be2"], p["m2"], p["v2"])
    h2 = h2 + h1[:, :64]
    h3 = bn(jnp.maximum(h2 @ p["w3"] + p["b3"], 0.0), p["g3"], p["be3"], p["m3"], p["v3"])
    h3 = h3 + h2[:, :32]
    return h3 @ p["wo"] + p["bo"]


if __name__ == "__main__":
    key = jax.random.PRNGKey(0)
    k_x, k_p = jax.random.split(key)

    # Small demo shapes; block_b=16 exercises the multi-tile grid + batch
    # padding path (B=40 -> 3 tiles of 16 with 8 padded rows).
    B, INPUT_DIM = 40, 32
    x = jax.random.normal(k_x, (B, INPUT_DIM), jnp.float32)
    params = init_params(k_p, INPUT_DIM)

    y = neural_network_forward(x, params, block_b=16)
    y = jax.block_until_ready(y)

    y_ref = reference_forward(x, params)
    assert y.shape == (B, 1), y.shape
    # bf16 MXU operands -> loosened tolerance vs the pure-f32 reference.
    assert jnp.allclose(y, y_ref, atol=5e-2, rtol=5e-2), (
        float(jnp.max(jnp.abs(y - y_ref)))
    )
    print("KERNEL_OK")
</pallas_src>

<mosaic_0001>
module attributes {stable_mosaic.version = 11 : i64} {
  func.func @_mlp_kernel(%arg0: i32, %arg1: memref<16x32xbf16, #tpu.memory_space<vmem>>, %arg2: memref<32x128xbf16, #tpu.memory_space<vmem>>, %arg3: memref<1x128xf32, #tpu.memory_space<vmem>>, %arg4: memref<1x128xf32, #tpu.memory_space<vmem>>, %arg5: memref<1x128xf32, #tpu.memory_space<vmem>>, %arg6: memref<128x64xbf16, #tpu.memory_space<vmem>>, %arg7: memref<1x64xf32, #tpu.memory_space<vmem>>, %arg8: memref<1x64xf32, #tpu.memory_space<vmem>>, %arg9: memref<1x64xf32, #tpu.memory_space<vmem>>, %arg10: memref<64x32xbf16, #tpu.memory_space<vmem>>, %arg11: memref<1x32xf32, #tpu.memory_space<vmem>>, %arg12: memref<1x32xf32, #tpu.memory_space<vmem>>, %arg13: memref<1x32xf32, #tpu.memory_space<vmem>>, %arg14: memref<1x32xf32, #tpu.memory_space<vmem>>, %arg15: memref<1x1xf32, #tpu.memory_space<vmem>>, %arg16: memref<16x1xf32, #tpu.memory_space<vmem>>) attributes {dimension_semantics = [#tpu.dimension_semantics<parallel>], iteration_bounds = array<i64: 3>, scalar_prefetch = 0 : i64, scratch_operands = 0 : i64, tpu.core_type = #tpu.core_type<tc>, window_params = [{transform_indices = @transform_0, window_bounds = array<i64: 16, 32>}, {pipeline_mode = #tpu.pipeline_mode<synchronous>, transform_indices = @transform_1, window_bounds = array<i64: 32, 128>}, {pipeline_mode = #tpu.pipeline_mode<synchronous>, transform_indices = @transform_2, window_bounds = array<i64: 1, 128>}, {pipeline_mode = #tpu.pipeline_mode<synchronous>, transform_indices = @transform_3, window_bounds = array<i64: 1, 128>}, {pipeline_mode = #tpu.pipeline_mode<synchronous>, transform_indices = @transform_4, window_bounds = array<i64: 1, 128>}, {pipeline_mode = #tpu.pipeline_mode<synchronous>, transform_indices = @transform_5, window_bounds = array<i64: 128, 64>}, {pipeline_mode = #tpu.pipeline_mode<synchronous>, transform_indices = @transform_6, window_bounds = array<i64: 1, 64>}, {pipeline_mode = #tpu.pipeline_mode<synchronous>, transform_indices = @transform_7, window_bounds = array<i64: 1, 64>}, {pipeline_mode = #tpu.pipeline_mode<synchronous>, transform_indices = @transform_8, window_bounds = array<i64: 1, 64>}, {pipeline_mode = #tpu.pipeline_mode<synchronous>, transform_indices = @transform_9, window_bounds = array<i64: 64, 32>}, {pipeline_mode = #tpu.pipeline_mode<synchronous>, transform_indices = @transform_10, window_bounds = array<i64: 1, 32>}, {pipeline_mode = #tpu.pipeline_mode<synchronous>, transform_indices = @transform_11, window_bounds = array<i64: 1, 32>}, {pipeline_mode = #tpu.pipeline_mode<synchronous>, transform_indices = @transform_12, window_bounds = array<i64: 1, 32>}, {pipeline_mode = #tpu.pipeline_mode<synchronous>, transform_indices = @transform_13, window_bounds = array<i64: 1, 32>}, {pipeline_mode = #tpu.pipeline_mode<synchronous>, transform_indices = @transform_14, window_bounds = array<i64: 1, 1>}, {transform_indices = @transform_15, window_bounds = array<i64: 16, 1>}]} {
    %c0 = arith.constant 0 : index
    %c0_0 = arith.constant 0 : index
    %0 = vector.load %arg3[%c0, %c0_0] : memref<1x128xf32, #tpu.memory_space<vmem>>, vector<1x128xf32>
    %c0_1 = arith.constant 0 : index
    %c0_2 = arith.constant 0 : index
    %1 = vector.load %arg4[%c0_1, %c0_2] : memref<1x128xf32, #tpu.memory_space<vmem>>, vector<1x128xf32>
    %c0_3 = arith.constant 0 : index
    %c0_4 = arith.constant 0 : index
    %2 = vector.load %arg5[%c0_3, %c0_4] : memref<1x128xf32, #tpu.memory_space<vmem>>, vector<1x128xf32>
    %c0_5 = arith.constant 0 : index
    %c0_6 = arith.constant 0 : index
    %3 = vector.load %arg7[%c0_5, %c0_6] : memref<1x64xf32, #tpu.memory_space<vmem>>, vector<1x64xf32>
    %c0_7 = arith.constant 0 : index
    %c0_8 = arith.constant 0 : index
    %4 = vector.load %arg8[%c0_7, %c0_8] : memref<1x64xf32, #tpu.memory_space<vmem>>, vector<1x64xf32>
    %c0_9 = arith.constant 0 : index
    %c0_10 = arith.constant 0 : index
    %5 = vector.load %arg9[%c0_9, %c0_10] : memref<1x64xf32, #tpu.memory_space<vmem>>, vector<1x64xf32>
    %c0_11 = arith.constant 0 : index
    %c0_12 = arith.constant 0 : index
    %6 = vector.load %arg11[%c0_11, %c0_12] : memref<1x32xf32, #tpu.memory_space<vmem>>, vector<1x32xf32>
    %c0_13 = arith.constant 0 : index
    %c0_14 = arith.constant 0 : index
    %7 = vector.load %arg12[%c0_13, %c0_14] : memref<1x32xf32, #tpu.memory_space<vmem>>, vector<1x32xf32>
    %c0_15 = arith.constant 0 : index
    %c0_16 = arith.constant 0 : index
    %8 = vector.load %arg13[%c0_15, %c0_16] : memref<1x32xf32, #tpu.memory_space<vmem>>, vector<1x32xf32>
    %c0_17 = arith.constant 0 : index
    %c0_18 = arith.constant 0 : index
    %9 = vector.load %arg14[%c0_17, %c0_18] : memref<1x32xf32, #tpu.memory_space<vmem>>, vector<1x32xf32>
    %c0_19 = arith.constant 0 : index
    %c0_20 = arith.constant 0 : index
    %10 = vector.load %arg15[%c0_19, %c0_20] : memref<1x1xf32, #tpu.memory_space<vmem>>, vector<1x1xf32>
    %c0_21 = arith.constant 0 : index
    %c0_22 = arith.constant 0 : index
    %11 = vector.load %arg1[%c0_21, %c0_22] : memref<16x32xbf16, #tpu.memory_space<vmem>>, vector<16x32xbf16>
    %c0_23 = arith.constant 0 : index
    %c0_24 = arith.constant 0 : index
    %12 = vector.load %arg2[%c0_23, %c0_24] : memref<32x128xbf16, #tpu.memory_space<vmem>>, vector<32x128xbf16>
    %cst = arith.constant dense<0.000000e+00> : vector<16x128xf32>
    %13 = tpu.matmul %11, %12, %cst {dimension_numbers = #tpu.dot_dimension_numbers<[1], [0], [0], [1], [0, 0, 1, 1], [], []>} : vector<16x32xbf16>, vector<32x128xbf16>, vector<16x128xf32> -> vector<16x128xf32>
    %14 = vector.broadcast %0 : vector<1x128xf32> to vector<16x128xf32>
    %15 = arith.addf %13, %14 : vector<16x128xf32>
    %cst_25 = arith.constant 0.000000e+00 : f32
    %16 = vector.broadcast %cst_25 : f32 to vector<16x128xf32>
    %17 = arith.maximumf %15, %16 : vector<16x128xf32>
    %18 = vector.broadcast %1 : vector<1x128xf32> to vector<16x128xf32>
    %19 = arith.mulf %17, %18 : vector<16x128xf32>
    %20 = vector.broadcast %2 : vector<1x128xf32> to vector<16x128xf32>
    %21 = arith.addf %19, %20 : vector<16x128xf32>
    %22 = arith.truncf %21 : vector<16x128xf32> to vector<16x128xbf16>
    %c0_26 = arith.constant 0 : index
    %c0_27 = arith.constant 0 : index
    %23 = vector.load %arg6[%c0_26, %c0_27] : memref<128x64xbf16, #tpu.memory_space<vmem>>, vector<128x64xbf16>
    %cst_28 = arith.constant dense<0.000000e+00> : vector<16x64xf32>
    %24 = tpu.matmul %22, %23, %cst_28 {dimension_numbers = #tpu.dot_dimension_numbers<[1], [0], [0], [1], [0, 0, 1, 1], [], []>} : vector<16x128xbf16>, vector<128x64xbf16>, vector<16x64xf32> -> vector<16x64xf32>
    %25 = vector.broadcast %3 : vector<1x64xf32> to vector<16x64xf32>
    %26 = arith.addf %24, %25 : vector<16x64xf32>
    %cst_29 = arith.constant 0.000000e+00 : f32
    %27 = vector.broadcast %cst_29 : f32 to vector<16x64xf32>
    %28 = arith.maximumf %26, %27 : vector<16x64xf32>
    %29 = vector.broadcast %4 : vector<1x64xf32> to vector<16x64xf32>
    %30 = arith.mulf %28, %29 : vector<16x64xf32>
    %31 = vector.broadcast %5 : vector<1x64xf32> to vector<16x64xf32>
    %32 = arith.addf %30, %31 : vector<16x64xf32>
    %33 = vector.extract_strided_slice %21 {offsets = [0, 0], sizes = [16, 64], strides = [1, 1]} : vector<16x128xf32> to vector<16x64xf32>
    %34 = arith.addf %32, %33 : vector<16x64xf32>
    %35 = arith.truncf %34 : vector<16x64xf32> to vector<16x64xbf16>
    %c0_30 = arith.constant 0 : index
    %c0_31 = arith.constant 0 : index
    %36 = vector.load %arg10[%c0_30, %c0_31] : memref<64x32xbf16, #tpu.memory_space<vmem>>, vector<64x32xbf16>
    %cst_32 = arith.constant dense<0.000000e+00> : vector<16x32xf32>
    %37 = tpu.matmul %35, %36, %cst_32 {dimension_numbers = #tpu.dot_dimension_numbers<[1], [0], [0], [1], [0, 0, 1, 1], [], []>} : vector<16x64xbf16>, vector<64x32xbf16>, vector<16x32xf32> -> vector<16x32xf32>
    %38 = vector.broadcast %6 : vector<1x32xf32> to vector<16x32xf32>
    %39 = arith.addf %37, %38 : vector<16x32xf32>
    %cst_33 = arith.constant 0.000000e+00 : f32
    %40 = vector.broadcast %cst_33 : f32 to vector<16x32xf32>
    %41 = arith.maximumf %39, %40 : vector<16x32xf32>
    %42 = vector.broadcast %7 : vector<1x32xf32> to vector<16x32xf32>
    %43 = arith.mulf %41, %42 : vector<16x32xf32>
    %44 = vector.broadcast %8 : vector<1x32xf32> to vector<16x32xf32>
    %45 = arith.addf %43, %44 : vector<16x32xf32>
    %46 = vector.extract_strided_slice %34 {offsets = [0, 0], sizes = [16, 32], strides = [1, 1]} : vector<16x64xf32> to vector<16x32xf32>
    %47 = arith.addf %45, %46 : vector<16x32xf32>
    %48 = vector.broadcast %9 : vector<1x32xf32> to vector<16x32xf32>
    %49 = arith.mulf %47, %48 : vector<16x32xf32>
    %cst_34 = arith.constant dense<0.000000e+00> : vector<16xf32>
    %50 = vector.multi_reduction <add>, %49, %cst_34 [1] : vector<16x32xf32> to vector<16xf32>
    %51 = vector.shape_cast %50 : vector<16xf32> to vector<16x1xf32>
    %52 = vector.broadcast %10 : vector<1x1xf32> to vector<16x1xf32>
    %53 = arith.addf %51, %52 : vector<16x1xf32>
    %c0_35 = arith.constant 0 : index
    %c0_36 = arith.constant 0 : index
    %54 = vector.load %arg16[%c0_35, %c0_36] : memref<16x1xf32, #tpu.memory_space<vmem>>, vector<16x1xf32>
    tpu.vector_store %arg16[%c0_35, %c0_36], %53 {strides = array<i32>} : memref<16x1xf32, #tpu.memory_space<vmem>>, vector<16x1xf32>,
    return
  }
  func.func @transform_0(%arg0: i32) -> (i32, i32) {
    %c0_i32 = arith.constant 0 : i32
    %c0_i32_0 = arith.constant 0 : i32
    return %arg0, %c0_i32 : i32, i32
  }
  func.func @transform_1(%arg0: i32) -> (i32, i32) {
    %c0_i32 = arith.constant 0 : i32
    %c0_i32_0 = arith.constant 0 : i32
    %c0_i32_1 = arith.constant 0 : i32
    return %c0_i32, %c0_i32_0 : i32, i32
  }
  func.func @transform_2(%arg0: i32) -> (i32, i32) {
    %c0_i32 = arith.constant 0 : i32
    %c0_i32_0 = arith.constant 0 : i32
    %c0_i32_1 = arith.constant 0 : i32
    return %c0_i32, %c0_i32_0 : i32, i32
  }
  func.func @transform_3(%arg0: i32) -> (i32, i32) {
    %c0_i32 = arith.constant 0 : i32
    %c0_i32_0 = arith.constant 0 : i32
    %c0_i32_1 = arith.constant 0 : i32
    return %c0_i32, %c0_i32_0 : i32, i32
  }
  func.func @transform_4(%arg0: i32) -> (i32, i32) {
    %c0_i32 = arith.constant 0 : i32
    %c0_i32_0 = arith.constant 0 : i32
    %c0_i32_1 = arith.constant 0 : i32
    return %c0_i32, %c0_i32_0 : i32, i32
  }
  func.func @transform_5(%arg0: i32) -> (i32, i32) {
    %c0_i32 = arith.constant 0 : i32
    %c0_i32_0 = arith.constant 0 : i32
    %c0_i32_1 = arith.constant 0 : i32
    return %c0_i32, %c0_i32_0 : i32, i32
  }
  func.func @transform_6(%arg0: i32) -> (i32, i32) {
    %c0_i32 = arith.constant 0 : i32
    %c0_i32_0 = arith.constant 0 : i32
    %c0_i32_1 = arith.constant 0 : i32
    return %c0_i32, %c0_i32_0 : i32, i32
  }
  func.func @transform_7(%arg0: i32) -> (i32, i32) {
    %c0_i32 = arith.constant 0 : i32
    %c0_i32_0 = arith.constant 0 : i32
    %c0_i32_1 = arith.constant 0 : i32
    return %c0_i32, %c0_i32_0 : i32, i32
  }
  func.func @transform_8(%arg0: i32) -> (i32, i32) {
    %c0_i32 = arith.constant 0 : i32
    %c0_i32_0 = arith.constant 0 : i32
    %c0_i32_1 = arith.constant 0 : i32
    return %c0_i32, %c0_i32_0 : i32, i32
  }
  func.func @transform_9(%arg0: i32) -> (i32, i32) {
    %c0_i32 = arith.constant 0 : i32
    %c0_i32_0 = arith.constant 0 : i32
    %c0_i32_1 = arith.constant 0 : i32
    return %c0_i32, %c0_i32_0 : i32, i32
  }
  func.func @transform_10(%arg0: i32) -> (i32, i32) {
    %c0_i32 = arith.constant 0 : i32
    %c0_i32_0 = arith.constant 0 : i32
    %c0_i32_1 = arith.constant 0 : i32
    return %c0_i32, %c0_i32_0 : i32, i32
  }
  func.func @transform_11(%arg0: i32) -> (i32, i32) {
    %c0_i32 = arith.constant 0 : i32
    %c0_i32_0 = arith.constant 0 : i32
    %c0_i32_1 = arith.constant 0 : i32
    return %c0_i32, %c0_i32_0 : i32, i32
  }
  func.func @transform_12(%arg0: i32) -> (i32, i32) {
    %c0_i32 = arith.constant 0 : i32
    %c0_i32_0 = arith.constant 0 : i32
    %c0_i32_1 = arith.constant 0 : i32
    return %c0_i32, %c0_i32_0 : i32, i32
  }
  func.func @transform_13(%arg0: i32) -> (i32, i32) {
    %c0_i32 = arith.constant 0 : i32
    %c0_i32_0 = arith.constant 0 : i32
    %c0_i32_1 = arith.constant 0 : i32
    return %c0_i32, %c0_i32_0 : i32, i32
  }
  func.func @transform_14(%arg0: i32) -> (i32, i32) {
    %c0_i32 = arith.constant 0 : i32
    %c0_i32_0 = arith.constant 0 : i32
    %c0_i32_1 = arith.constant 0 : i32
    return %c0_i32, %c0_i32_0 : i32, i32
  }
  func.func @transform_15(%arg0: i32) -> (i32, i32) {
    %c0_i32 = arith.constant 0 : i32
    %c0_i32_0 = arith.constant 0 : i32
    return %arg0, %c0_i32 : i32, i32
  }
}

</mosaic_0001>

<llo_original>
// kernel: tpu_custom_call.1
$region0: #{tpu_custom_call.1}
  #allocation0 [shape = 'u32[]', space=smem, size = 0x4, offset = 0x4, fixed_abs, tag = 'smem constant byte address 0x4 - core index']
  #allocation1 [shape = 'u32[144,128]{1,0:T(1,128)}', space=vmem, size = 0x12000, scoped, tag = 'internal scratch']
  #allocation2 [shape = 'f32[1,1]{1,0:T(1,128)S(1)}', space=vmem, size = 0x200, scoped, tag = 'scoped memory for tpu_custom_call.1']
  %s0 = inlined_call_operand.vmem [shape: bf16[48,32], index: 0, kind: input, shape index: {}]
  %s1 = inlined_call_operand.vmem [shape: bf16[32,128], index: 1, kind: input, shape index: {}]
  %s2 = inlined_call_operand.vmem [shape: f32[1,128], index: 2, kind: input, shape index: {}]
  %s3 = inlined_call_operand.vmem [shape: f32[1,128], index: 3, kind: input, shape index: {}]
  %s4 = inlined_call_operand.vmem [shape: f32[1,128], index: 4, kind: input, shape index: {}]
  %s5 = inlined_call_operand.vmem [shape: bf16[128,64], index: 5, kind: input, shape index: {}]
  %s6 = inlined_call_operand.vmem [shape: f32[1,64], index: 6, kind: input, shape index: {}]
  %s7 = inlined_call_operand.vmem [shape: f32[1,64], index: 7, kind: input, shape index: {}]
  %s8 = inlined_call_operand.vmem [shape: f32[1,64], index: 8, kind: input, shape index: {}]
  %s9 = inlined_call_operand.vmem [shape: bf16[64,32], index: 9, kind: input, shape index: {}]
  %s10 = inlined_call_operand.vmem [shape: f32[1,32], index: 10, kind: input, shape index: {}]
  %s11 = inlined_call_operand.vmem [shape: f32[1,32], index: 11, kind: input, shape index: {}]
  %s12 = inlined_call_operand.vmem [shape: f32[1,32], index: 12, kind: input, shape index: {}]
  %s13 = inlined_call_operand.vmem [shape: f32[1,32], index: 13, kind: input, shape index: {}]
  %s14 = inlined_call_operand.<no memory space> [shape: f32[1,1], index: 14, kind: input, shape index: {}]
  %s15 = inlined_call_operand.vmem [shape: f32[48,1], index: 15, kind: output, shape index: {}]
  %s16 = sld [smem:[#allocation0]]
  $region93: #{tpu_custom_call.1} parent=0
    _
  %s18 = ssub.s32 1, %s16
  %s19 = scalar_select 0, %s18, %s16
  %v20 = vstv %s14
  %21 = vst [vmem:[#allocation2] sm:$0x1] %v20
  loop: start=0, step=1, limit=5
  $region2: #{tpu_custom_call.1} parent=0 // loop_pre_header
    _
  $region3: #{tpu_custom_call.1} parent=0 // loop_header
    %s23 = sphi 0, %s27
    %p24 = scmp.ge.s32.totalorder %s23, 5
    %s33 = sphi 0, %s35
    %s36 = sphi 0, %s33
    %s37 = sphi 0, %s36
    %s53 = sphi 0, %s37
    %s57 = sphi 0, %s57
    %s59 = sphi 0, %s57
    %s60 = sphi 0, %s59
    %s74 = sphi 0, %s60
    %s78 = sphi 0, %s78
    %s80 = sphi 0, %s78
    %s81 = sphi 0, %s80
    %s95 = sphi 0, %s81
    %s99 = sphi 0, %s99
    %s101 = sphi 0, %s99
    %s102 = sphi 0, %s101
    %s116 = sphi 0, %s102
    %s120 = sphi 0, %s120
    %s122 = sphi 0, %s120
    %s123 = sphi 0, %s122
    %s137 = sphi 0, %s123
    %s141 = sphi 0, %s141
    %s143 = sphi 0, %s141
    %s144 = sphi 0, %s143
    %s158 = sphi 0, %s144
    %s162 = sphi 0, %s162
    %s164 = sphi 0, %s162
    %s165 = sphi 0, %s164
    %s179 = sphi 0, %s165
    %s183 = sphi 0, %s183
    %s185 = sphi 0, %s183
    %s186 = sphi 0, %s185
    %s200 = sphi 0, %s186
    %s204 = sphi 0, %s204
    %s206 = sphi 0, %s204
    %s207 = sphi 0, %s206
    %s221 = sphi 0, %s207
    %s225 = sphi 0, %s225
    %s227 = sphi 0, %s225
    %s228 = sphi 0, %s227
    %s242 = sphi 0, %s228
    %s246 = sphi 0, %s246
    %s248 = sphi 0, %s246
    %s249 = sphi 0, %s248
    %s263 = sphi 0, %s249
    %s267 = sphi 0, %s267
    %s269 = sphi 0, %s267
    %s270 = sphi 0, %s269
    %s284 = sphi 0, %s270
    %s288 = sphi 0, %s288
    %s290 = sphi 0, %s288
    %s291 = sphi 0, %s290
    %s305 = sphi 0, %s291
    %s309 = sphi 0, %s309
    %s311 = sphi 0, %s309
    %s312 = sphi 0, %s311
    %s326 = sphi 0, %s312
    %s330 = sphi 0, %s330
    %s332 = sphi 0, %s330
    %s333 = sphi 0, %s332
    %s347 = sphi 0, %s333
    %s353 = sphi 0, %s355
    %s356 = sphi 0, %s353
    %s357 = sphi 0, %s356
    %s373 = sphi 0, %s357
  $region4: #{tpu_custom_call.1} parent=0 // loop_header_branch
    %26 = sbr.rel (%p24) target = $region8
  $region5: #{tpu_custom_call.1} parent=0 // loop_body
    %s28 = ssub.s32 %s23, 1
    %s29 = ssub.s32 %s23, 2
    %s30 = sadd.s32 %s23, 1
    %s31 = ssub.s32 %s23, %s30
    %p32 = scmp.eq.s32.totalorder %s31, 0
    %s34 = sadd.s32 %s33, 1
    %s35 = scalar_select %p32, %s33, %s34
    %p38 = pneg %p32
    %p39 = scmp.eq.s32.totalorder %s23, 2
    %p40 = por %p38, %p39
    %p41 = scmp.ne.s32.totalorder %s33, %s36
    %p42 = scmp.eq.s32.totalorder %s23, 0
    %p43 = por %p41, %p42
    %p44 = scmp.ne.s32.totalorder %s33, %s36
    %p45 = scmp.eq.s32.totalorder %s28, 2
    %p46 = por %p44, %p45
    %p47 = scmp.ne.s32.totalorder %s36, %s37
    %p48 = scmp.eq.s32.totalorder %s28, 0
    %p49 = por %p47, %p48
    %p50 = scmp.ne.s32.totalorder %s36, %s37
    %p51 = scmp.eq.s32.totalorder %s29, 2
    %p52 = por %p50, %p51
    %p54 = scmp.ne.s32.totalorder %s37, %s53
    %p55 = scmp.eq.s32.totalorder %s29, 0
    %p56 = por %p54, %p55
    %s58 = sadd.s32 %s57, 1
    %p61 = scmp.eq.s32.totalorder %s23, 2
    %p62 = scmp.ne.s32.totalorder %s57, %s59
    %p63 = scmp.eq.s32.totalorder %s23, 0
    %p64 = por %p62, %p63
    %p65 = scmp.ne.s32.totalorder %s57, %s59
    %p66 = scmp.eq.s32.totalorder %s28, 2
    %p67 = por %p65, %p66
    %p68 = scmp.ne.s32.totalorder %s59, %s60
    %p69 = scmp.eq.s32.totalorder %s28, 0
    %p70 = por %p68, %p69
    %p71 = scmp.ne.s32.totalorder %s59, %s60
    %p72 = scmp.eq.s32.totalorder %s29, 2
    %p73 = por %p71, %p72
    %p75 = scmp.ne.s32.totalorder %s60, %s74
    %p76 = scmp.eq.s32.totalorder %s29, 0
    %p77 = por %p75, %p76
    %s79 = sadd.s32 %s78, 1
    %p82 = scmp.eq.s32.totalorder %s23, 2
    %p83 = scmp.ne.s32.totalorder %s78, %s80
    %p84 = scmp.eq.s32.totalorder %s23, 0
    %p85 = por %p83, %p84
    %p86 = scmp.ne.s32.totalorder %s78, %s80
    %p87 = scmp.eq.s32.totalorder %s28, 2
    %p88 = por %p86, %p87
    %p89 = scmp.ne.s32.totalorder %s80, %s81
    %p90 = scmp.eq.s32.totalorder %s28, 0
    %p91 = por %p89, %p90
    %p92 = scmp.ne.s32.totalorder %s80, %s81
    %p93 = scmp.eq.s32.totalorder %s29, 2
    %p94 = por %p92, %p93
    %p96 = scmp.ne.s32.totalorder %s81, %s95
    %p97 = scmp.eq.s32.totalorder %s29, 0
    %p98 = por %p96, %p97
    %s100 = sadd.s32 %s99, 1
    %p103 = scmp.eq.s32.totalorder %s23, 2
    %p104 = scmp.ne.s32.totalorder %s99, %s101
    %p105 = scmp.eq.s32.totalorder %s23, 0
    %p106 = por %p104, %p105
    %p107 = scmp.ne.s32.totalorder %s99, %s101
    %p108 = scmp.eq.s32.totalorder %s28, 2
    %p109 = por %p107, %p108
    %p110 = scmp.ne.s32.totalorder %s101, %s102
    %p111 = scmp.eq.s32.totalorder %s28, 0
    %p112 = por %p110, %p111
    %p113 = scmp.ne.s32.totalorder %s101, %s102
    %p114 = scmp.eq.s32.totalorder %s29, 2
    %p115 = por %p113, %p114
    %p117 = scmp.ne.s32.totalorder %s102, %s116
    %p118 = scmp.eq.s32.totalorder %s29, 0
    %p119 = por %p117, %p118
    %s121 = sadd.s32 %s120, 1
    %p124 = scmp.eq.s32.totalorder %s23, 2
    %p125 = scmp.ne.s32.totalorder %s120, %s122
    %p126 = scmp.eq.s32.totalorder %s23, 0
    %p127 = por %p125, %p126
    %p128 = scmp.ne.s32.totalorder %s120, %s122
    %p129 = scmp.eq.s32.totalorder %s28, 2
    %p130 = por %p128, %p129
    %p131 = scmp.ne.s32.totalorder %s122, %s123
    %p132 = scmp.eq.s32.totalorder %s28, 0
    %p133 = por %p131, %p132
    %p134 = scmp.ne.s32.totalorder %s122, %s123
    %p135 = scmp.eq.s32.totalorder %s29, 2
    %p136 = por %p134, %p135
    %p138 = scmp.ne.s32.totalorder %s123, %s137
    %p139 = scmp.eq.s32.totalorder %s29, 0
    %p140 = por %p138, %p139
    %s142 = sadd.s32 %s141, 1
    %p145 = scmp.eq.s32.totalorder %s23, 2
    %p146 = scmp.ne.s32.totalorder %s141, %s143
    %p147 = scmp.eq.s32.totalorder %s23, 0
    %p148 = por %p146, %p147
    %p149 = scmp.ne.s32.totalorder %s141, %s143
    %p150 = scmp.eq.s32.totalorder %s28, 2
    %p151 = por %p149, %p150
    %p152 = scmp.ne.s32.totalorder %s143, %s144
    %p153 = scmp.eq.s32.totalorder %s28, 0
    %p154 = por %p152, %p153
    %p155 = scmp.ne.s32.totalorder %s143, %s144
    %p156 = scmp.eq.s32.totalorder %s29, 2
    %p157 = por %p155, %p156
    %p159 = scmp.ne.s32.totalorder %s144, %s158
    %p160 = scmp.eq.s32.totalorder %s29, 0
    %p161 = por %p159, %p160
    %s163 = sadd.s32 %s162, 1
    %p166 = scmp.eq.s32.totalorder %s23, 2
    %p167 = scmp.ne.s32.totalorder %s162, %s164
    %p168 = scmp.eq.s32.totalorder %s23, 0
    %p169 = por %p167, %p168
    %p170 = scmp.ne.s32.totalorder %s162, %s164
    %p171 = scmp.eq.s32.totalorder %s28, 2
    %p172 = por %p170, %p171
    %p173 = scmp.ne.s32.totalorder %s164, %s165
    %p174 = scmp.eq.s32.totalorder %s28, 0
    %p175 = por %p173, %p174
    %p176 = scmp.ne.s32.totalorder %s164, %s165
    %p177 = scmp.eq.s32.totalorder %s29, 2
    %p178 = por %p176, %p177
    %p180 = scmp.ne.s32.totalorder %s165, %s179
    %p181 = scmp.eq.s32.totalorder %s29, 0
    %p182 = por %p180, %p181
    %s184 = sadd.s32 %s183, 1
    %p187 = scmp.eq.s32.totalorder %s23, 2
    %p188 = scmp.ne.s32.totalorder %s183, %s185
    %p189 = scmp.eq.s32.totalorder %s23, 0
    %p190 = por %p188, %p189
    %p191 = scmp.ne.s32.totalorder %s183, %s185
    %p192 = scmp.eq.s32.totalorder %s28, 2
    %p193 = por %p191, %p192
    %p194 = scmp.ne.s32.totalorder %s185, %s186
    %p195 = scmp.eq.s32.totalorder %s28, 0
    %p196 = por %p194, %p195
    %p197 = scmp.ne.s32.totalorder %s185, %s186
    %p198 = scmp.eq.s32.totalorder %s29, 2
    %p199 = por %p197, %p198
    %p201 = scmp.ne.s32.totalorder %s186, %s200
    %p202 = scmp.eq.s32.totalorder %s29, 0
    %p203 = por %p201, %p202
    %s205 = sadd.s32 %s204, 1
    %p208 = scmp.eq.s32.totalorder %s23, 2
    %p209 = scmp.ne.s32.totalorder %s204, %s206
    %p210 = scmp.eq.s32.totalorder %s23, 0
    %p211 = por %p209, %p210
    %p212 = scmp.ne.s32.totalorder %s204, %s206
    %p213 = scmp.eq.s32.totalorder %s28, 2
    %p214 = por %p212, %p213
    %p215 = scmp.ne.s32.totalorder %s206, %s207
    %p216 = scmp.eq.s32.totalorder %s28, 0
    %p217 = por %p215, %p216
    %p218 = scmp.ne.s32.totalorder %s206, %s207
    %p219 = scmp.eq.s32.totalorder %s29, 2
    %p220 = por %p218, %p219
    %p222 = scmp.ne.s32.totalorder %s207, %s221
    %p223 = scmp.eq.s32.totalorder %s29, 0
    %p224 = por %p222, %p223
    %s226 = sadd.s32 %s225, 1
    %p229 = scmp.eq.s32.totalorder %s23, 2
    %p230 = scmp.ne.s32.totalorder %s225, %s227
    %p231 = scmp.eq.s32.totalorder %s23, 0
    %p232 = por %p230, %p231
    %p233 = scmp.ne.s32.totalorder %s225, %s227
    %p234 = scmp.eq.s32.totalorder %s28, 2
    %p235 = por %p233, %p234
    %p236 = scmp.ne.s32.totalorder %s227, %s228
    %p237 = scmp.eq.s32.totalorder %s28, 0
    %p238 = por %p236, %p237
    %p239 = scmp.ne.s32.totalorder %s227, %s228
    %p240 = scmp.eq.s32.totalorder %s29, 2
    %p241 = por %p239, %p240
    %p243 = scmp.ne.s32.totalorder %s228, %s242
    %p244 = scmp.eq.s32.totalorder %s29, 0
    %p245 = por %p243, %p244
    %s247 = sadd.s32 %s246, 1
    %p250 = scmp.eq.s32.totalorder %s23, 2
    %p251 = scmp.ne.s32.totalorder %s246, %s248
    %p252 = scmp.eq.s32.totalorder %s23, 0
    %p253 = por %p251, %p252
    %p254 = scmp.ne.s32.totalorder %s246, %s248
    %p255 = scmp.eq.s32.totalorder %s28, 2
    %p256 = por %p254, %p255
    %p257 = scmp.ne.s32.totalorder %s248, %s249
    %p258 = scmp.eq.s32.totalorder %s28, 0
    %p259 = por %p257, %p258
    %p260 = scmp.ne.s32.totalorder %s248, %s249
    %p261 = scmp.eq.s32.totalorder %s29, 2
    %p262 = por %p260, %p261
    %p264 = scmp.ne.s32.totalorder %s249, %s263
    %p265 = scmp.eq.s32.totalorder %s29, 0
    %p266 = por %p264, %p265
    %s268 = sadd.s32 %s267, 1
    %p271 = scmp.eq.s32.totalorder %s23, 2
    %p272 = scmp.ne.s32.totalorder %s267, %s269
    %p273 = scmp.eq.s32.totalorder %s23, 0
    %p274 = por %p272, %p273
    %p275 = scmp.ne.s32.totalorder %s267, %s269
    %p276 = scmp.eq.s32.totalorder %s28, 2
    %p277 = por %p275, %p276
    %p278 = scmp.ne.s32.totalorder %s269, %s270
    %p279 = scmp.eq.s32.totalorder %s28, 0
    %p280 = por %p278, %p279
    %p281 = scmp.ne.s32.totalorder %s269, %s270
    %p282 = scmp.eq.s32.totalorder %s29, 2
    %p283 = por %p281, %p282
    %p285 = scmp.ne.s32.totalorder %s270, %s284
    %p286 = scmp.eq.s32.totalorder %s29, 0
    %p287 = por %p285, %p286
    %s289 = sadd.s32 %s288, 1
    %p292 = scmp.eq.s32.totalorder %s23, 2
    %p293 = scmp.ne.s32.totalorder %s288, %s290
    %p294 = scmp.eq.s32.totalorder %s23, 0
    %p295 = por %p293, %p294
    %p296 = scmp.ne.s32.totalorder %s288, %s290
    %p297 = scmp.eq.s32.totalorder %s28, 2
    %p298 = por %p296, %p297
    %p299 = scmp.ne.s32.totalorder %s290, %s291
    %p300 = scmp.eq.s32.totalorder %s28, 0
    %p301 = por %p299, %p300
    %p302 = scmp.ne.s32.totalorder %s290, %s291
    %p303 = scmp.eq.s32.totalorder %s29, 2
    %p304 = por %p302, %p303
    %p306 = scmp.ne.s32.totalorder %s291, %s305
    %p307 = scmp.eq.s32.totalorder %s29, 0
    %p308 = por %p306, %p307
    %s310 = sadd.s32 %s309, 1
    %p313 = scmp.eq.s32.totalorder %s23, 2
    %p314 = scmp.ne.s32.totalorder %s309, %s311
    %p315 = scmp.eq.s32.totalorder %s23, 0
    %p316 = por %p314, %p315
    %p317 = scmp.ne.s32.totalorder %s309, %s311
    %p318 = scmp.eq.s32.totalorder %s28, 2
    %p319 = por %p317, %p318
    %p320 = scmp.ne.s32.totalorder %s311, %s312
    %p321 = scmp.eq.s32.totalorder %s28, 0
    %p322 = por %p320, %p321
    %p323 = scmp.ne.s32.totalorder %s311, %s312
    %p324 = scmp.eq.s32.totalorder %s29, 2
    %p325 = por %p323, %p324
    %p327 = scmp.ne.s32.totalorder %s312, %s326
    %p328 = scmp.eq.s32.totalorder %s29, 0
    %p329 = por %p327, %p328
    %s331 = sadd.s32 %s330, 1
    %p334 = scmp.eq.s32.totalorder %s23, 2
    %p335 = scmp.ne.s32.totalorder %s330, %s332
    %p336 = scmp.eq.s32.totalorder %s23, 0
    %p337 = por %p335, %p336
    %p338 = scmp.ne.s32.totalorder %s330, %s332
    %p339 = scmp.eq.s32.totalorder %s28, 2
    %p340 = por %p338, %p339
    %p341 = scmp.ne.s32.totalorder %s332, %s333
    %p342 = scmp.eq.s32.totalorder %s28, 0
    %p343 = por %p341, %p342
    %p344 = scmp.ne.s32.totalorder %s332, %s333
    %p345 = scmp.eq.s32.totalorder %s29, 2
    %p346 = por %p344, %p345
    %p348 = scmp.ne.s32.totalorder %s333, %s347
    %p349 = scmp.eq.s32.totalorder %s29, 0
    %p350 = por %p348, %p349
    %s351 = ssub.s32 %s23, %s30
    %p352 = scmp.eq.s32.totalorder %s351, 0
    %s354 = sadd.s32 %s353, 1
    %s355 = scalar_select %p352, %s353, %s354
    %p358 = pneg %p352
    %p359 = scmp.eq.s32.totalorder %s23, 2
    %p360 = por %p358, %p359
    %p361 = scmp.ne.s32.totalorder %s353, %s356
    %p362 = scmp.eq.s32.totalorder %s23, 0
    %p363 = por %p361, %p362
    %p364 = scmp.ne.s32.totalorder %s353, %s356
    %p365 = scmp.eq.s32.totalorder %s28, 2
    %p366 = por %p364, %p365
    %p367 = scmp.ne.s32.totalorder %s356, %s357
    %p368 = scmp.eq.s32.totalorder %s28, 0
    %p369 = por %p367, %p368
    %p370 = scmp.ne.s32.totalorder %s356, %s357
    %p371 = scmp.eq.s32.totalorder %s29, 2
    %p372 = por %p370, %p371
    %p374 = scmp.ne.s32.totalorder %s357, %s373
    %p375 = scmp.eq.s32.totalorder %s29, 0
    %p376 = por %p374, %p375
    %p377 = scmp.le.s32.totalorder 1, %s23
    %p378 = scmp.lt.s32.totalorder %s23, 4
    %p379 = pnand %p377, %p378
    %p380 = pneg %p379
    // Predicated region
    $region9: #{tpu_custom_call.1} parent=5 // pred_check
      _
    $region10: #{tpu_custom_call.1} parent=5 // pred_check_branch
      %382 = sbr.rel (%p379) target = $region12
    $region11: #{tpu_custom_call.1} parent=5 // pred_region
      %s383 = ssub.s32 %s23, 1
      // Predicated region
      $region13: #{tpu_custom_call.1} parent=11 // pred_check
        %p384 = pneg %p70
      $region14: #{tpu_custom_call.1} parent=11 // pred_check_branch
        %386 = sbr.rel (%p384) target = $region16
      $region15: #{tpu_custom_call.1} parent=11 // pred_region
        _
      $region16: #{tpu_custom_call.1} parent=11 // pred_fallthru
        _
      // Predicated region
      $region17: #{tpu_custom_call.1} parent=11 // pred_check
        %p387 = pneg %p91
      $region18: #{tpu_custom_call.1} parent=11 // pred_check_branch
        %389 = sbr.rel (%p387) target = $region20
      $region19: #{tpu_custom_call.1} parent=11 // pred_region
        _
      $region20: #{tpu_custom_call.1} parent=11 // pred_fallthru
        _
      // Predicated region
      $region21: #{tpu_custom_call.1} parent=11 // pred_check
        %p390 = pneg %p112
      $region22: #{tpu_custom_call.1} parent=11 // pred_check_branch
        %392 = sbr.rel (%p390) target = $region24
      $region23: #{tpu_custom_call.1} parent=11 // pred_region
        _
      $region24: #{tpu_custom_call.1} parent=11 // pred_fallthru
        _
      // Predicated region
      $region25: #{tpu_custom_call.1} parent=11 // pred_check
        %p393 = pneg %p133
      $region26: #{tpu_custom_call.1} parent=11 // pred_check_branch
        %395 = sbr.rel (%p393) target = $region28
      $region27: #{tpu_custom_call.1} parent=11 // pred_region
        _
      $region28: #{tpu_custom_call.1} parent=11 // pred_fallthru
        _
      // Predicated region
      $region29: #{tpu_custom_call.1} parent=11 // pred_check
        %p396 = pneg %p154
      $region30: #{tpu_custom_call.1} parent=11 // pred_check_branch
        %398 = sbr.rel (%p396) target = $region32
      $region31: #{tpu_custom_call.1} parent=11 // pred_region
        _
      $region32: #{tpu_custom_call.1} parent=11 // pred_fallthru
        _
      // Predicated region
      $region33: #{tpu_custom_call.1} parent=11 // pred_check
        %p399 = pneg %p175
      $region34: #{tpu_custom_call.1} parent=11 // pred_check_branch
        %401 = sbr.rel (%p399) target = $region36
      $region35: #{tpu_custom_call.1} parent=11 // pred_region
        _
      $region36: #{tpu_custom_call.1} parent=11 // pred_fallthru
        _
      // Predicated region
      $region37: #{tpu_custom_call.1} parent=11 // pred_check
        %p402 = pneg %p196
      $region38: #{tpu_custom_call.1} parent=11 // pred_check_branch
        %404 = sbr.rel (%p402) target = $region40
      $region39: #{tpu_custom_call.1} parent=11 // pred_region
        _
      $region40: #{tpu_custom_call.1} parent=11 // pred_fallthru
        _
      // Predicated region
      $region41: #{tpu_custom_call.1} parent=11 // pred_check
        %p405 = pneg %p217
      $region42: #{tpu_custom_call.1} parent=11 // pred_check_branch
        %407 = sbr.rel (%p405) target = $region44
      $region43: #{tpu_custom_call.1} parent=11 // pred_region
        _
      $region44: #{tpu_custom_call.1} parent=11 // pred_fallthru
        _
      // Predicated region
      $region45: #{tpu_custom_call.1} parent=11 // pred_check
        %p408 = pneg %p238
      $region46: #{tpu_custom_call.1} parent=11 // pred_check_branch
        %410 = sbr.rel (%p408) target = $region48
      $region47: #{tpu_custom_call.1} parent=11 // pred_region
        _
      $region48: #{tpu_custom_call.1} parent=11 // pred_fallthru
        _
      // Predicated region
      $region49: #{tpu_custom_call.1} parent=11 // pred_check
        %p411 = pneg %p259
      $region50: #{tpu_custom_call.1} parent=11 // pred_check_branch
        %413 = sbr.rel (%p411) target = $region52
      $region51: #{tpu_custom_call.1} parent=11 // pred_region
        _
      $region52: #{tpu_custom_call.1} parent=11 // pred_fallthru
        _
      // Predicated region
      $region53: #{tpu_custom_call.1} parent=11 // pred_check
        %p414 = pneg %p280
      $region54: #{tpu_custom_call.1} parent=11 // pred_check_branch
        %416 = sbr.rel (%p414) target = $region56
      $region55: #{tpu_custom_call.1} parent=11 // pred_region
        _
      $region56: #{tpu_custom_call.1} parent=11 // pred_fallthru
        _
      // Predicated region
      $region57: #{tpu_custom_call.1} parent=11 // pred_check
        %p417 = pneg %p301
      $region58: #{tpu_custom_call.1} parent=11 // pred_check_branch
        %419 = sbr.rel (%p417) target = $region60
      $region59: #{tpu_custom_call.1} parent=11 // pred_region
        _
      $region60: #{tpu_custom_call.1} parent=11 // pred_fallthru
        _
      // Predicated region
      $region61: #{tpu_custom_call.1} parent=11 // pred_check
        %p420 = pneg %p322
      $region62: #{tpu_custom_call.1} parent=11 // pred_check_branch
        %422 = sbr.rel (%p420) target = $region64
      $region63: #{tpu_custom_call.1} parent=11 // pred_region
        _
      $region64: #{tpu_custom_call.1} parent=11 // pred_fallthru
        _
      // Predicated region
      $region65: #{tpu_custom_call.1} parent=11 // pred_check
        %p423 = pneg %p343
      $region66: #{tpu_custom_call.1} parent=11 // pred_check_branch
        %425 = sbr.rel (%p423) target = $region68
      $region67: #{tpu_custom_call.1} parent=11 // pred_region
        _
      $region68: #{tpu_custom_call.1} parent=11 // pred_fallthru
        _
    $region12: #{tpu_custom_call.1} parent=5 // pred_fallthru
      _
    %p426 = scmp.lt.s32.totalorder %s23, 3
    // Predicated region
    $region69: #{tpu_custom_call.1} parent=5 // pred_check
      %p427 = pneg %p426
    $region70: #{tpu_custom_call.1} parent=5 // pred_check_branch
      %429 = sbr.rel (%p427) target = $region72
    $region71: #{tpu_custom_call.1} parent=5 // pred_region
      // Predicated region
      $region73: #{tpu_custom_call.1} parent=71 // pred_check
        %p430 = pneg %p43
      $region74: #{tpu_custom_call.1} parent=71 // pred_check_branch
        %432 = sbr.rel (%p430) target = $region76
      $region75: #{tpu_custom_call.1} parent=71 // pred_region
        %s433 = smul.u32 2, %s23
        %p434 = scmp.lt.s32.totalorder %s433, 5
        %s435 = scalar_select %p434, %s433, 5
        %s436 = smul.addr %s435, 4
        %s437 = scalar_lea.vmem %s0, %s436
        %s438 = smul.u32 2, %s23
      $region76: #{tpu_custom_call.1} parent=71 // pred_fallthru
        _
    $region72: #{tpu_custom_call.1} parent=5 // pred_fallthru
      _
    %p439 = scmp.le.s32.totalorder 1, %s23
    %p440 = scmp.lt.s32.totalorder %s23, 4
    %p441 = pnand %p439, %p440
    %p442 = pneg %p441
    // Predicated region
    $region77: #{tpu_custom_call.1} parent=5 // pred_check
      _
    $region78: #{tpu_custom_call.1} parent=5 // pred_check_branch
      %444 = sbr.rel (%p441) target = $region80
    $region79: #{tpu_custom_call.1} parent=5 // pred_region
      %s445 = ssub.s32 %s23, 1
      %s446 = smul.u32 2, %s28
      %p447 = scmp.lt.s32.totalorder %s446, 5
      %s448 = scalar_select %p447, %s446, 5
      %s449 = smul.addr %s448, 4
      %s450 = scalar_lea.vmem %s0, %s449
      %p451 = pneg %p49
      %p452 = pneg %p46
      %p453 = pneg %p70
      %p454 = pneg %p67
      %p455 = pneg %p91
      %p456 = pneg %p88
      %p457 = pneg %p112
      %p458 = pneg %p109
      %p459 = pneg %p133
      %p460 = pneg %p130
      %p461 = pneg %p154
      %p462 = pneg %p151
      %p463 = pneg %p175
      %p464 = pneg %p172
      %p465 = pneg %p196
      %p466 = pneg %p193
      %p467 = pneg %p217
      %p468 = pneg %p214
      %p469 = pneg %p238
      %p470 = pneg %p235
      %p471 = pneg %p259
      %p472 = pneg %p256
      %p473 = pneg %p280
      %p474 = pneg %p277
      %p475 = pneg %p301
      %p476 = pneg %p298
      %p477 = pneg %p322
      %p478 = pneg %p319
      %p479 = pneg %p343
      %p480 = pneg %p340
      %p481 = pneg %p369
      %p482 = pneg %p366
      %s483 = smul.u32 2, %s28
      %p484 = scmp.lt.s32.totalorder %s483, 5
      %s485 = scalar_select %p484, %s483, 5
      %s486 = smul.addr %s485, 8
      %s487 = scalar_lea.vmem %s15, %s486
      %s488 = smul.u32 2, %s28
      %p489 = scmp.lt.s32.totalorder %s488, 5
      %s490 = scalar_select %p489, %s488, 5
      %s491 = smul.addr %s490, 4
      %s492 = scalar_lea.vmem %s0, %s491
      %s493 = smul.u32 2, %s28
      %s494 = smul.u32 2, %s28
      %p495 = scmp.lt.s32.totalorder %s494, 5
      %s496 = scalar_select %p495, %s494, 5
      %s497 = smul.addr %s496, 8
      %s498 = scalar_lea.vmem %s15, %s497
      %s499 = smul.u32 2, %s28
      %v501 = vld [vmem:[%s2] sm:$0x1]
      %v502 = vld [vmem:[%s3] sm:$0x1]
      %v503 = vld [vmem:[%s4] sm:$0x1]
      %v504 = vld [vmem:[%s6] sm:$0x1]
      %v505 = vld [vmem:[%s7] sm:$0x1]
      %v506 = vld [vmem:[%s8] sm:$0x1]
      %v507 = vld [vmem:[%s10] sm:$0x1]
      %v508 = vld [vmem:[%s11] sm:$0x1]
      %v509 = vld [vmem:[%s12] sm:$0x1]
      %v510 = vld [vmem:[%s13] sm:$0x1]
      %v511 = vld [vmem:[#allocation2] sm:$0x1]
      %v512 = vld [vmem:[%s492] sm:$0xf]
      %v513 = vld [vmem:[%s492 + $0x4] sm:$0xf]
      %v514 = vld [vmem:[%s1] sm:$0xf]
      %v515 = vld [vmem:[%s1 + $0x4] sm:$0xf]
      %v516 = vld [vmem:[%s1 + $0x8] sm:$0xf]
      %v517 = vld [vmem:[%s1 + $0xc] sm:$0xf]
      %v519 = vlaneseq
      %v520 = vshrl.u32 %v519, 7
      %v521 = vsub.s32 0, %v520
      %v522 = vrot.slane %v501, %v521
      %v526 = vunpack.c.l.b16 %v512
      %v527 = vunpack.c.l.b16 %v513
      %v528 = vpack.c.b16 %v527, %v526
      %v533 = vunpack.c.l.b16 %v514
      %v534 = vunpack.c.l.b16 %v515
      %v535 = vunpack.c.l.b16 %v516
      %v536 = vunpack.c.l.b16 %v517
      %v537 = vpack.c.b16 %v534, %v533
      %v538 = vpack.c.b16 %v536, %v535
      %vm541 = vcmask 261120
      %v543 = vsel %vm541, %v528, 0
      %545 = vmatprep.subr.bf16.mxu0 0
      %546 = vmatpush1.bf16.msra.mxu0 0
      %547 = vmatprep.subr.bf16.mxu0 0
      %548 = vmatpush1.bf16.msra.mxu0 0
      %549 = vmatprep.subr.bf16.mxu0 0
      %550 = vmatpush1.bf16.msra.mxu0 0
      %551 = vmatprep.subr.bf16.mxu0 0
      %552 = vmatpush1.bf16.msra.mxu0 0
      %553 = vmatprep.subr.bf16.mxu0 0
      %554 = vmatpush1.bf16.msra.mxu0 0
      %555 = vmatprep.subr.bf16.mxu0 0
      %556 = vmatpush1.bf16.msra.mxu0 0
      %557 = vmatprep.subr.bf16.mxu0 0
      %558 = vmatpush1.bf16.msra.mxu0 %v538
      %559 = vmatprep.subr.bf16.mxu0 0
      %560 = vmatpush1.bf16.msra.mxu0 %v537
      %561 = vmatprep.subr.bf16.mxu0 0
      %562 = vmatpush2.bf16.msra.mxu0 0
      %563 = vmatprep.subr.bf16.mxu0 0
      %564 = vmatpush2.bf16.msra.mxu0 0
      %565 = vmatprep.subr.bf16.mxu0 0
      %566 = vmatpush2.bf16.msra.mxu0 0
      %567 = vmatprep.subr.bf16.mxu0 0
      %568 = vmatpush2.bf16.msra.mxu0 0
      %569 = vmatprep.subr.bf16.mxu0 0
      %570 = vmatpush2.bf16.msra.mxu0 0
      %571 = vmatprep.subr.bf16.mxu0 0
      %572 = vmatpush2.bf16.msra.mxu0 0
      %573 = vmatprep.subr.bf16.mxu0 0
      %574 = vmatpush2.bf16.msra.mxu0 0
      %575 = vmatprep.subr.bf16.mxu0 0
      %576 = vmatpush2.bf16.msra.mxu0 0
      %577 = vmatprep.mubr.bf16.mxu0 0
      %578 = vmatmul.mubr.bf16.gmra.mxu0 %v543
      %v579 = vpop.f32.mrf.mxu0
      %v580 = vadd.f32 %v522, %v579
      %v581 = vpop.f32.mrf.mxu0
      %v582 = vpop.f32.mrf.mxu0
      %v583 = vadd.f32 %v522, %v582
      %v584 = vpop.f32.mrf.mxu0
      %585 = vdwg.mxu0
      %v586 = vmax.f32 %v580, 0.0
      %v587 = vmax.f32 %v583, 0.0
      %v589 = vlaneseq
      %v590 = vshrl.u32 %v589, 7
      %v591 = vsub.s32 0, %v590
      %v592 = vrot.slane %v502, %v591
      %v594 = vmul.f32 %v586, %v592
      %v595 = vmul.f32 %v587, %v592
      %v597 = vlaneseq
      %v598 = vshrl.u32 %v597, 7
      %v599 = vsub.s32 0, %v598
      %v600 = vrot.slane %v503, %v599
      %v602 = vadd.f32 %v594, %v600
      %v603 = vadd.f32 %v595, %v600
      %v604 = vpack.c.bf16 %v603, %v602
      %v605 = vld [vmem:[%s5] sm:$0xf]
      %v606 = vld [vmem:[%s5 + $0x4] sm:$0xf]
      %v607 = vld [vmem:[%s5 + $0x8] sm:$0xf]
      %v608 = vld [vmem:[%s5 + $0xc] sm:$0xf]
      %v609 = vld [vmem:[%s5 + $0x10] sm:$0xf]
      %v610 = vld [vmem:[%s5 + $0x14] sm:$0xf]
      %v611 = vld [vmem:[%s5 + $0x18] sm:$0xf]
      %v612 = vld [vmem:[%s5 + $0x1c] sm:$0xf]
      %v613 = vld [vmem:[%s5 + $0x20] sm:$0xf]
      %v614 = vld [vmem:[%s5 + $0x24] sm:$0xf]
      %v615 = vld [vmem:[%s5 + $0x28] sm:$0xf]
      %v616 = vld [vmem:[%s5 + $0x2c] sm:$0xf]
      %v617 = vld [vmem:[%s5 + $0x30] sm:$0xf]
      %v618 = vld [vmem:[%s5 + $0x34] sm:$0xf]
      %v619 = vld [vmem:[%s5 + $0x38] sm:$0xf]
      %v620 = vld [vmem:[%s5 + $0x3c] sm:$0xf]
      %v622 = vlaneseq
      %v623 = vshrl.u32 %v622, 7
      %v624 = vsub.s32 0, %v623
      %v625 = vrot.slane %v504, %v624
      %v643 = vunpack.c.l.b16 %v605
      %v644 = vunpack.c.l.b16 %v606
      %v645 = vunpack.c.l.b16 %v607
      %v646 = vunpack.c.l.b16 %v608
      %v647 = vunpack.c.l.b16 %v609
      %v648 = vunpack.c.l.b16 %v610
      %v649 = vunpack.c.l.b16 %v611
      %v650 = vunpack.c.l.b16 %v612
      %v651 = vunpack.c.l.b16 %v613
      %v652 = vunpack.c.l.b16 %v614
      %v653 = vunpack.c.l.b16 %v615
      %v654 = vunpack.c.l.b16 %v616
      %v655 = vunpack.c.l.b16 %v617
      %v656 = vunpack.c.l.b16 %v618
      %v657 = vunpack.c.l.b16 %v619
      %v658 = vunpack.c.l.b16 %v620
      %v659 = vpack.c.b16 %v644, %v643
      %v660 = vpack.c.b16 %v646, %v645
      %v661 = vpack.c.b16 %v648, %v647
      %v662 = vpack.c.b16 %v650, %v649
      %v663 = vpack.c.b16 %v652, %v651
      %v664 = vpack.c.b16 %v654, %v653
      %v665 = vpack.c.b16 %v656, %v655
      %v666 = vpack.c.b16 %v658, %v657
      %675 = vmatprep.subr.bf16.mxu0 0
      %676 = vmatpush1.bf16.msra.mxu0 %v666
      %677 = vmatprep.subr.bf16.mxu0 0
      %678 = vmatpush1.bf16.msra.mxu0 %v665
      %679 = vmatprep.subr.bf16.mxu0 0
      %680 = vmatpush1.bf16.msra.mxu0 %v664
      %681 = vmatprep.subr.bf16.mxu0 0
      %682 = vmatpush1.bf16.msra.mxu0 %v663
      %683 = vmatprep.subr.bf16.mxu0 0
      %684 = vmatpush1.bf16.msra.mxu0 %v662
      %685 = vmatprep.subr.bf16.mxu0 0
      %686 = vmatpush1.bf16.msra.mxu0 %v661
      %687 = vmatprep.subr.bf16.mxu0 0
      %688 = vmatpush1.bf16.msra.mxu0 %v660
      %689 = vmatprep.subr.bf16.mxu0 0
      %690 = vmatpush1.bf16.msra.mxu0 %v659
      %691 = vmatprep.subr.bf16.mxu0 0
      %692 = vmatpush2.bf16.msra.mxu0 0
      %693 = vmatprep.subr.bf16.mxu0 0
      %694 = vmatpush2.bf16.msra.mxu0 0
      %695 = vmatprep.subr.bf16.mxu0 0
      %696 = vmatpush2.bf16.msra.mxu0 0
      %697 = vmatprep.subr.bf16.mxu0 0
      %698 = vmatpush2.bf16.msra.mxu0 0
      %699 = vmatprep.subr.bf16.mxu0 0
      %700 = vmatpush2.bf16.msra.mxu0 0
      %701 = vmatprep.subr.bf16.mxu0 0
      %702 = vmatpush2.bf16.msra.mxu0 0
      %703 = vmatprep.subr.bf16.mxu0 0
      %704 = vmatpush2.bf16.msra.mxu0 0
      %705 = vmatprep.subr.bf16.mxu0 0
      %706 = vmatpush2.bf16.msra.mxu0 0
      %707 = vmatprep.mubr.bf16.mxu0 0
      %708 = vmatmul.mubr.bf16.gmra.mxu0 %v604
      %v709 = vpop.f32.mrf.mxu0
      %v710 = vadd.f32 %v625, %v709
      %v711 = vpop.f32.mrf.mxu0
      %v712 = vpop.f32.mrf.mxu0
      %v713 = vadd.f32 %v625, %v712
      %v714 = vpop.f32.mrf.mxu0
      %715 = vdwg.mxu0
      %v716 = vmax.f32 %v710, 0.0
      %v717 = vmax.f32 %v713, 0.0
      %v719 = vlaneseq
      %v720 = vshrl.u32 %v719, 7
      %v721 = vsub.s32 0, %v720
      %v722 = vrot.slane %v505, %v721
      %v724 = vmul.f32 %v716, %v722
      %v725 = vmul.f32 %v717, %v722
      %v727 = vlaneseq
      %v728 = vshrl.u32 %v727, 7
      %v729 = vsub.s32 0, %v728
      %v730 = vrot.slane %v506, %v729
      %v732 = vadd.f32 %v724, %v730
      %v733 = vadd.f32 %v725, %v730
      %v734 = vadd.f32 %v732, %v602
      %v735 = vadd.f32 %v733, %v603
      %v736 = vpack.c.bf16 %v735, %v734
      %v737 = vld [vmem:[%s9] sm:$0xf]
      %v738 = vld [vmem:[%s9 + $0x4] sm:$0xf]
      %v739 = vld [vmem:[%s9 + $0x8] sm:$0xf]
      %v740 = vld [vmem:[%s9 + $0xc] sm:$0xf]
      %v741 = vld [vmem:[%s9 + $0x10] sm:$0xf]
      %v742 = vld [vmem:[%s9 + $0x14] sm:$0xf]
      %v743 = vld [vmem:[%s9 + $0x18] sm:$0xf]
      %v744 = vld [vmem:[%s9 + $0x1c] sm:$0xf]
      %v746 = vlaneseq
      %v747 = vshrl.u32 %v746, 7
      %v748 = vsub.s32 0, %v747
      %v749 = vrot.slane %v507, %v748
      %v759 = vunpack.c.l.b16 %v737
      %v760 = vunpack.c.l.b16 %v738
      %v761 = vunpack.c.l.b16 %v739
      %v762 = vunpack.c.l.b16 %v740
      %v763 = vunpack.c.l.b16 %v741
      %v764 = vunpack.c.l.b16 %v742
      %v765 = vunpack.c.l.b16 %v743
      %v766 = vunpack.c.l.b16 %v744
      %v767 = vpack.c.b16 %v760, %v759
      %v768 = vpack.c.b16 %v762, %v761
      %v769 = vpack.c.b16 %v764, %v763
      %v770 = vpack.c.b16 %v766, %v765
      %vm775 = vcmask 523264
      %v777 = vsel %vm775, %v736, 0
      %779 = vmatprep.subr.bf16.mxu0 0
      %780 = vmatpush1.bf16.msra.mxu0 0
      %781 = vmatprep.subr.bf16.mxu0 0
      %782 = vmatpush1.bf16.msra.mxu0 0
      %783 = vmatprep.subr.bf16.mxu0 0
      %784 = vmatpush1.bf16.msra.mxu0 0
      %785 = vmatprep.subr.bf16.mxu0 0
      %786 = vmatpush1.bf16.msra.mxu0 0
      %787 = vmatprep.subr.bf16.mxu0 0
      %788 = vmatpush1.bf16.msra.mxu0 %v770
      %789 = vmatprep.subr.bf16.mxu0 0
      %790 = vmatpush1.bf16.msra.mxu0 %v769
      %791 = vmatprep.subr.bf16.mxu0 0
      %792 = vmatpush1.bf16.msra.mxu0 %v768
      %793 = vmatprep.subr.bf16.mxu0 0
      %794 = vmatpush1.bf16.msra.mxu0 %v767
      %795 = vmatprep.subr.bf16.mxu0 0
      %796 = vmatpush2.bf16.msra.mxu0 0
      %797 = vmatprep.subr.bf16.mxu0 0
      %798 = vmatpush2.bf16.msra.mxu0 0
      %799 = vmatprep.subr.bf16.mxu0 0
      %800 = vmatpush2.bf16.msra.mxu0 0
      %801 = vmatprep.subr.bf16.mxu0 0
      %802 = vmatpush2.bf16.msra.mxu0 0
      %803 = vmatprep.subr.bf16.mxu0 0
      %804 = vmatpush2.bf16.msra.mxu0 0
      %805 = vmatprep.subr.bf16.mxu0 0
      %806 = vmatpush2.bf16.msra.mxu0 0
      %807 = vmatprep.subr.bf16.mxu0 0
      %808 = vmatpush2.bf16.msra.mxu0 0
      %809 = vmatprep.subr.bf16.mxu0 0
      %810 = vmatpush2.bf16.msra.mxu0 0
      %811 = vmatprep.mubr.bf16.mxu0 0
      %812 = vmatmul.mubr.bf16.gmra.mxu0 %v777
      %v813 = vpop.f32.mrf.mxu0
      %v814 = vadd.f32 %v749, %v813
      %v815 = vpop.f32.mrf.mxu0
      %v816 = vpop.f32.mrf.mxu0
      %v817 = vadd.f32 %v749, %v816
      %v818 = vpop.f32.mrf.mxu0
      %819 = vdwg.mxu0
      %v820 = vmax.f32 %v814, 0.0
      %v821 = vmax.f32 %v817, 0.0
      %v823 = vlaneseq
      %v824 = vshrl.u32 %v823, 7
      %v825 = vsub.s32 0, %v824
      %v826 = vrot.slane %v508, %v825
      %v828 = vmul.f32 %v820, %v826
      %v829 = vmul.f32 %v821, %v826
      %v831 = vlaneseq
      %v832 = vshrl.u32 %v831, 7
      %v833 = vsub.s32 0, %v832
      %v834 = vrot.slane %v509, %v833
      %v836 = vadd.f32 %v828, %v834
      %v837 = vadd.f32 %v829, %v834
      %v838 = vadd.f32 %v836, %v734
      %v839 = vadd.f32 %v837, %v735
      %v841 = vlaneseq
      %v842 = vshrl.u32 %v841, 7
      %v843 = vsub.s32 0, %v842
      %v844 = vrot.slane %v510, %v843
      %v846 = vmul.f32 %v838, %v844
      %v847 = vmul.f32 %v839, %v844
      %v848 = vsel %vm541, %v846, 0.0
      %849 = vadd.xlane.f32.xlu0 %v848
      %v850 = vpop.xlane.xlu0 %849
      %v851 = vsel %vm541, %v847, 0.0
      %852 = vadd.xlane.f32.xlu0 %v851
      %v853 = vpop.xlane.xlu0 %852
      %v855 = vlaneseq
      %v856 = vshrl.u32 %v855, 7
      %v857 = vsub.s32 0, %v856
      %v858 = vrot.slane %v511, %v857
      %v860 = vadd.f32 %v850, %v858
      %v861 = vadd.f32 %v853, %v858
      %vm862 = vcmask 7168
      %863 = vst.msk [vmem:[%s498] sm:$0xff] %vm862, %v860
      %864 = vst.msk [vmem:[%s498 + $0x8] sm:$0xff] %vm862, %v861
      %s865 = smul.u32 2, %s28
      %p866 = scmp.lt.s32.totalorder %s865, 5
      %s867 = scalar_select %p866, %s865, 5
      %s868 = smul.addr %s867, 8
      %s869 = scalar_lea.vmem %s15, %s868
      // Predicated region
      $region81: #{tpu_custom_call.1} parent=79 // pred_check
        %p870 = pneg %p366
      $region82: #{tpu_custom_call.1} parent=79 // pred_check_branch
        %872 = sbr.rel (%p870) target = $region84
      $region83: #{tpu_custom_call.1} parent=79 // pred_region
        %s873 = smul.u32 2, %s28
      $region84: #{tpu_custom_call.1} parent=79 // pred_fallthru
        _
    $region80: #{tpu_custom_call.1} parent=5 // pred_fallthru
      _
    %p874 = scmp.le.s32.totalorder 2, %s23
    // Predicated region
    $region85: #{tpu_custom_call.1} parent=5 // pred_check
      %p875 = pneg %p874
    $region86: #{tpu_custom_call.1} parent=5 // pred_check_branch
      %877 = sbr.rel (%p875) target = $region88
    $region87: #{tpu_custom_call.1} parent=5 // pred_region
      %s878 = ssub.s32 %s23, 2
      // Predicated region
      $region89: #{tpu_custom_call.1} parent=87 // pred_check
        %p879 = pneg %p372
      $region90: #{tpu_custom_call.1} parent=87 // pred_check_branch
        %881 = sbr.rel (%p879) target = $region92
      $region91: #{tpu_custom_call.1} parent=87 // pred_region
        %s882 = smul.u32 2, %s29
        %p883 = scmp.lt.s32.totalorder %s882, 5
        %s884 = scalar_select %p883, %s882, 5
        %s885 = smul.addr %s884, 8
        %s886 = scalar_lea.vmem %s15, %s885
      $region92: #{tpu_custom_call.1} parent=87 // pred_fallthru
        _
    $region88: #{tpu_custom_call.1} parent=5 // pred_fallthru
      _
  $region6: #{tpu_custom_call.1} parent=0 // loop_footer
    %s27 = sadd.s32 1, %s23
  $region7: #{tpu_custom_call.1} parent=0 // loop_footer_branch
    %22 = sbr.rel target = $region3
  $region8: #{tpu_custom_call.1} parent=0 // loop_exit
    _

</llo_original>
